<compile_context>
chip_gen: v5e
topology: v5e:2x2
jax: 0.10.0
libtpu: 0.0.40
codegen_flags: <defaults>
</compile_context>

<pallas_src>
import jax
import jax.numpy as jnp
import numpy as np
from jax.experimental import pallas as pl
from jax.experimental.pallas import tpu as pltpu

THRESHOLD = 0.5
_CHUNK = 8          # terms multiplied on the VPU per jnp.log (EUP relief).
                    # NOTE: product of <=8 terms in (0,1] can underflow f32 only
                    # for pathologically tiny terms; tiny divergence vs the
                    # strict sum-of-logs reference is expected (within ~1e-5).
_MAX_TB = 128
_MAX_TD = 2048

_VMEM_LIMIT_CACHE = [None]


def _round_up(x, m):
    return ((x + m - 1) // m) * m


def _vmem_limit_bytes():
    if _VMEM_LIMIT_CACHE[0] is None:
        cap = None
        try:
            info = pltpu.get_tpu_info()
            cap = int(getattr(info, "vmem_capacity_bytes", 0)) or None
        except Exception:
            cap = None
        if cap is None:
            cap = 64 * 1024 * 1024          # conservative (v7x physical VMEM)
        _VMEM_LIMIT_CACHE[0] = (cap // 4) * 3   # 3/4 of physical: 96 MiB on v5e/v6e, 48 MiB on v7x
    return _VMEM_LIMIT_CACHE[0]


def _pad2(a, rows, cols):
    if a.shape[0] == rows and a.shape[1] == cols:
        return a
    return jnp.pad(a, ((0, rows - a.shape[0]), (0, cols - a.shape[1])))


# --------------------------------------------------------------------------
# BinarizeLayer kernel: lane-dense single-pass output  [x_disc | b | 1 - b]
# (no HBM-materialized repeat(x_cont, n); direct slice writes, no concat)
# --------------------------------------------------------------------------
def _make_binarize_kernel(Dd, C, n):
    Cn = C * n
    if Dd > 0:
        def kernel(xd_ref, xc_ref, cl_ref, out_ref):
            out_ref[:, :Dd] = xd_ref[...].astype(out_ref.dtype)
            for c in range(C):                       # static unroll, all 2-D ops
                b = jnp.where(xc_ref[:, c:c + 1] > cl_ref[c:c + 1, :], 1.0, 0.0)  # (TB, n)
                out_ref[:, Dd + c * n:Dd + (c + 1) * n] = b.astype(out_ref.dtype)
                out_ref[:, Dd + Cn + c * n:Dd + Cn + (c + 1) * n] = \
                    (1.0 - b).astype(out_ref.dtype)
        return kernel

    def kernel(xc_ref, cl_ref, out_ref):
        for c in range(C):
            b = jnp.where(xc_ref[:, c:c + 1] > cl_ref[c:c + 1, :], 1.0, 0.0)
            out_ref[:, c * n:(c + 1) * n] = b.astype(out_ref.dtype)
            out_ref[:, Cn + c * n:Cn + (c + 1) * n] = (1.0 - b).astype(out_ref.dtype)
    return kernel


def binarize_layer_forward(x, cl, disc_num, cont_num, use_not=False):
    """x: (B, disc+cont), cl: (n, cont) -> (B, disc' + 2*cont*n), torch order."""
    B = x.shape[0]
    x_disc = x[:, :disc_num].astype(jnp.float32)
    if use_not:
        x_disc = jnp.concatenate([x_disc, 1.0 - x_disc], axis=1)
    if cont_num == 0:
        return x_disc

    n = cl.shape[0]
    x_cont = x[:, disc_num:].astype(jnp.float32)                 # (B, C)
    clT = cl.T.astype(jnp.float32)                               # (C, n): out col = c*n + t
    Dd = x_disc.shape[1]
    Cn = cont_num * n
    out_dim = Dd + 2 * Cn
    has_disc = Dd > 0

    if B <= _MAX_TB:
        TB, Bp = B, B
    else:
        TB, Bp = _MAX_TB, _round_up(B, _MAX_TB)

    def padB(a):
        return a if a.shape[0] == Bp else jnp.pad(a, ((0, Bp - a.shape[0]), (0, 0)))

    in_arrays = ([padB(x_disc)] if has_disc else []) + [padB(x_cont), clT]
    in_specs = ([pl.BlockSpec((TB, Dd), lambda b: (b, 0))] if has_disc else []) + [
        pl.BlockSpec((TB, cont_num), lambda b: (b, 0)),
        pl.BlockSpec((cont_num, n), lambda b: (0, 0)),
    ]

    out = pl.pallas_call(
        _make_binarize_kernel(Dd if has_disc else 0, cont_num, n),
        out_shape=jax.ShapeDtypeStruct((Bp, out_dim), jnp.float32),
        grid_spec=pltpu.PrefetchScalarGridSpec(
            num_scalar_prefetch=0,
            grid=(Bp // TB,),
            in_specs=in_specs,
            out_specs=pl.BlockSpec((TB, out_dim), lambda b: (b, 0)),
        ),
        compiler_params=pltpu.CompilerParams(dimension_semantics=("parallel",)),
    )(*in_arrays)
    return out[:B] if Bp != B else out


# --------------------------------------------------------------------------
# UnionLayer kernel: (B-parallel, D-reduction) grid, fused lane-dense outputs
# --------------------------------------------------------------------------
def _union_kernel(xc_ref, xb_ref, wc_ref, wd_ref, wcat_ref, thr_ref,
                  oc_ref, ob_ref, sacc, cacc):
    d = pl.program_id(1)
    nd = pl.num_programs(1)
    TB, TD = xc_ref.shape
    n = wc_ref.shape[0]
    n2p = sacc.shape[1]
    nch = TD // _CHUNK

    @pl.when(d == 0)
    def _init():
        sacc[...] = jnp.zeros_like(sacc)
        cacc[...] = jnp.zeros_like(cacc)

    # ---- continuous path (VPU + EUP): chunked log-of-partial-products ----
    xc = xc_ref[...]                                   # (TB, TD) f32
    wc = wc_ref[...]                                   # (n,  TD) f32
    wd = wd_ref[...]                                   # (n,  TD) f32
    one_m_xc = 1.0 - xc
    pc = None
    pd_ = None
    for k in range(_CHUNK):                            # CHUNK VPU muls per log
        lo, hi = k * nch, (k + 1) * nch
        tc = 1.0 - one_m_xc[:, None, lo:hi] * wc[None, :, lo:hi]   # (TB, n, nch)
        tdv = 1.0 - xc[:, None, lo:hi] * wd[None, :, lo:hi]        # (TB, n, nch)
        pc = tc if pc is None else pc * tc
        pd_ = tdv if pd_ is None else pd_ * tdv
    conj_ls = jnp.sum(jnp.log(pc), axis=2)             # (TB, n)
    dis_ls = jnp.sum(jnp.log(pd_), axis=2)             # (TB, n)
    contrib = jnp.concatenate([conj_ls, dis_ls], axis=1)           # (TB, 2n)
    sacc[:, :2 * n] = sacc[:, :2 * n] + contrib

    # ---- binarized path: one MXU dot against [Wcb ; Wdb] (exact 0/1 counts) ----
    dn = (((1,), (1,)), ((), ()))                      # contract last dims
    cacc[...] += jax.lax.dot_general(xb_ref[...], wcat_ref[...], dn,
                                     preferred_element_type=jnp.float32)

    @pl.when(d == nd - 1)
    def _finalize():
        col = jax.lax.broadcasted_iota(jnp.int32, (TB, n2p), 1)
        t = -1.0 / (-1.0 + sacc[...])
        # cols [0,n): conj = t ; cols [n,2n): dis = 1 - t ; pad cols sliced off.
        oc_ref[...] = jnp.where(col < n, t, 1.0 - t).astype(oc_ref.dtype)
        # conj_bin = 1 iff count(x & Wcb) == rowsum(Wcb); dis_bin = 1 iff count > 0.
        ob_ref[...] = jnp.where(cacc[...] > thr_ref[...], 1.0, 0.0).astype(ob_ref.dtype)


def _union_tiles(B, D, n, vmem_limit):
    """n-aware (TB, Bp, TD, Dp) selection so (TB, n, TD/CHUNK) temps fit VMEM."""
    temp_budget = max(vmem_limit // 3, 1 << 20)        # bytes for broadcast temps
    TB = min(B, _MAX_TB)
    # shrink TB when n is large (budget assumes TD tiles of ~128 lanes)
    while TB >= 16 and 4 * TB * n * 128 > temp_budget:
        TB //= 2
    if TB >= B:
        TB, Bp = B, B                                  # single full-extent batch block
    else:
        TB = max(8, (TB // 8) * 8)                     # multiple of 8 (sublane rule)
        Bp = _round_up(B, TB)
    # prefer a single full-extent D block (no weight re-fetch across batch tiles)
    Dp_full = _round_up(max(D, _CHUNK), _CHUNK)
    td_cap = temp_budget // (4 * TB * max(n, 1))
    if Dp_full <= max(td_cap, _CHUNK) and Dp_full <= _MAX_TD:
        TD, Dp = Dp_full, Dp_full
    else:
        TD = int(min(_MAX_TD, max(128, (td_cap // 128) * 128)))
        Dp = _round_up(D, TD)
    return TB, Bp, TD, Dp


def union_layer(x_cont, x_bin, wc, wd):
    """One UnionLayer; returns ((B, 2n) continuous, (B, 2n) binarized)."""
    B, D = x_cont.shape
    n = wc.shape[0]
    n2 = 2 * n
    n2p = _round_up(n2, 128)                           # lane-dense outputs / accumulators

    vmem_limit = _vmem_limit_bytes()
    TB, Bp, TD, Dp = _union_tiles(B, D, n, vmem_limit)
    nb, nd = Bp // TB, Dp // TD
    assert TD % _CHUNK == 0 and Dp % TD == 0

    # Hoisted binarized weights / thresholds (once per layer, not per B tile).
    wcb = wc > THRESHOLD
    wdb = wd > THRESHOLD
    wcat = jnp.concatenate([wcb, wdb], axis=0).astype(jnp.bfloat16)       # (2n, D)
    row_cnt = jnp.sum(wcb.astype(jnp.float32), axis=1)                    # (n,)
    thr = jnp.concatenate(
        [row_cnt - 0.5, jnp.full((n,), 0.5, jnp.float32)])[None, :]       # (1, 2n)

    # Zero padding along D is neutral: padded weights are 0 -> term=1 (log 0,
    # product 1) and zero MXU contribution. Padded batch rows are sliced off.
    xc_p = _pad2(x_cont.astype(jnp.float32), Bp, Dp)
    xb_p = _pad2(x_bin.astype(jnp.bfloat16), Bp, Dp)   # exact: x_bin is 0/1
    wc_p = _pad2(wc.astype(jnp.float32), n, Dp)
    wd_p = _pad2(wd.astype(jnp.float32), n, Dp)
    wcat_p = _pad2(wcat, n2p, Dp)
    thr_p = _pad2(thr, 1, n2p)

    grid_spec = pltpu.PrefetchScalarGridSpec(
        num_scalar_prefetch=0,
        grid=(nb, nd),                                 # B parallel, D reduction last
        in_specs=[
            pl.BlockSpec((TB, TD), lambda b, d: (b, d)),    # xc (f32)
            pl.BlockSpec((TB, TD), lambda b, d: (b, d)),    # xb (bf16)
            pl.BlockSpec((n, TD), lambda b, d: (0, d)),     # Wc (f32)
            pl.BlockSpec((n, TD), lambda b, d: (0, d)),     # Wd (f32)
            pl.BlockSpec((n2p, TD), lambda b, d: (0, d)),   # [Wcb;Wdb] (bf16)
            pl.BlockSpec((1, n2p), lambda b, d: (0, 0)),    # binarized thresholds
        ],
        out_specs=(
            pl.BlockSpec((TB, n2p), lambda b, d: (b, 0)),
            pl.BlockSpec((TB, n2p), lambda b, d: (b, 0)),
        ),
        scratch_shapes=[pltpu.VMEM((TB, n2p), jnp.float32),   # log-sums [conj|dis]
                        pltpu.VMEM((TB, n2p), jnp.float32)],  # MXU hit-counts
    )

    w_fetches = nb if nd > 1 else 1
    cost = pl.CostEstimate(
        flops=int(10 * Bp * n * Dp),
        transcendentals=int(2 * Bp * n * Dp // _CHUNK),
        bytes_accessed=int(6 * Bp * Dp                       # xc f32 + xb bf16
                           + w_fetches * (8 * n + 2 * n2p) * Dp
                           + 8 * Bp * n2p),
    )

    oc, ob = pl.pallas_call(
        _union_kernel,
        out_shape=(jax.ShapeDtypeStruct((Bp, n2p), jnp.float32),
                   jax.ShapeDtypeStruct((Bp, n2p), jnp.float32)),
        grid_spec=grid_spec,
        compiler_params=pltpu.CompilerParams(
            dimension_semantics=("parallel", "arbitrary"),
            vmem_limit_bytes=int(vmem_limit),
        ),
        cost_estimate=cost,
    )(xc_p, xb_p, wc_p, wd_p, wcat_p, thr_p)

    return oc[:B, :n2], ob[:B, :n2]


# --------------------------------------------------------------------------
# MLLP_bottom forward
# --------------------------------------------------------------------------
def mllp_bottom_forward(x, params, dim_list, use_not=False):
    """Returns (continuous_forward(x), binarized_forward(x))."""
    disc_num, cont_num = dim_list[0]
    x0 = binarize_layer_forward(x, params["binary1"]["cl"], disc_num, cont_num, use_not)

    # BinarizeLayer forward == binarized_forward, so both paths start identical.
    x_c = x_b = x0
    x_res_c = x_res_b = None
    for j, (wc, wd) in enumerate(params["unions"]):
        i = j + 1  # index in layer_list (0 was the BinarizeLayer)
        if i <= 1:
            xc_in, xb_in = x_c, x_b
        else:
            # TODO(synk): feed (x, x_res) as two D-reduction segments into the union
            # kernel (and fuse the whole stack into one pallas_call for tiny configs)
            # to remove this per-layer HBM concat round trip.
            xc_in = jnp.concatenate([x_c, x_res_c], axis=1) if x_res_c is not None else x_c
            xb_in = jnp.concatenate([x_b, x_res_b], axis=1) if x_res_b is not None else x_b
            x_res_c, x_res_b = x_c, x_b
        x_c, x_b = union_layer(xc_in, xb_in, wc, wd)
    return x_c, x_b


# --------------------------------------------------------------------------
# Parameter init (shapes follow MLLP_bottom.__init__ / BinarizeLayer / UnionLayer)
# --------------------------------------------------------------------------
def init_params(key, dim_list, use_not=False):
    disc_num, cont_num = dim_list[0]
    n1 = dim_list[1]
    n_union = len(dim_list) - 2
    keys = jax.random.split(key, 1 + 2 * n_union)

    cl = jax.random.normal(keys[0], (n1, cont_num), dtype=jnp.float32)
    bin_out = disc_num * (2 if use_not else 1) + n1 * cont_num * 2

    unions = []
    out_dims = [bin_out]
    prev = bin_out
    kidx = 1
    for i in range(2, len(dim_list)):
        num = prev
        if i >= 4:  # dense skip: concat with the output two layers back
            num += out_dims[-2]
        n = dim_list[i]
        # NOTE: PyTorch inits W = 0.5 * rand(n, num); we use rand in [0, 1) so
        # the binarized (W > 0.5) path is non-trivial. Shapes match the module.
        wc = jax.random.uniform(keys[kidx], (n, num), dtype=jnp.float32); kidx += 1
        wd = jax.random.uniform(keys[kidx], (n, num), dtype=jnp.float32); kidx += 1
        unions.append((wc, wd))
        prev = 2 * n
        out_dims.append(prev)
    return {"binary1": {"cl": cl}, "unions": unions}


# --------------------------------------------------------------------------
# Pure-JAX reference (mirrors the PyTorch forward), used for verification.
# --------------------------------------------------------------------------
def reference_forward(x, params, dim_list, use_not=False):
    disc_num, cont_num = dim_list[0]
    cl = params["binary1"]["cl"]
    x_disc = x[:, :disc_num]
    if use_not:
        x_disc = jnp.concatenate([x_disc, 1.0 - x_disc], axis=1)
    if cont_num > 0:
        x_cont = x[:, disc_num:]
        diff = x_cont[:, :, None] - cl.T[None, :, :]
        b = jnp.where(diff > 0, 1.0, 0.0).reshape(x.shape[0], -1)
        x0 = jnp.concatenate([x_disc, b, 1.0 - b], axis=1)
    else:
        x0 = x_disc

    def union_cont(xc, wc, wd):
        conj = -1.0 / (-1.0 + jnp.sum(jnp.log(1.0 - (1.0 - xc)[:, :, None] * wc.T[None]), axis=1))
        dis = 1.0 - (-1.0 / (-1.0 + jnp.sum(jnp.log(1.0 - xc[:, :, None] * wd.T[None]), axis=1)))
        return jnp.concatenate([conj, dis], axis=1)

    def union_bin(xb, wc, wd):
        wcb = jnp.where(wc > THRESHOLD, 1.0, 0.0)
        wdb = jnp.where(wd > THRESHOLD, 1.0, 0.0)
        conj = jnp.prod(1.0 - (1.0 - xb)[:, :, None] * wcb.T[None], axis=1)
        dis = 1.0 - jnp.prod(1.0 - xb[:, :, None] * wdb.T[None], axis=1)
        return jnp.concatenate([conj, dis], axis=1)

    x_c = x_b = x0
    x_res_c = x_res_b = None
    for j, (wc, wd) in enumerate(params["unions"]):
        i = j + 1
        if i > 1:
            xc_in = jnp.concatenate([x_c, x_res_c], axis=1) if x_res_c is not None else x_c
            xb_in = jnp.concatenate([x_b, x_res_b], axis=1) if x_res_b is not None else x_b
            x_res_c, x_res_b = x_c, x_b
        else:
            xc_in, xb_in = x_c, x_b
        x_c = union_cont(xc_in, wc, wd)
        x_b = union_bin(xb_in, wc, wd)
    return x_c, x_b


# --------------------------------------------------------------------------
if __name__ == "__main__":
    key = jax.random.PRNGKey(0)
    # dim_list = [(disc_features, cont_features), n_thresholds, n2, n3, n4]
    # -> BinarizeLayer, UnionLayer(8), UnionLayer(8), UnionLayer(8, with skip concat)
    dim_list = [(4, 3), 2, 8, 8, 8]
    use_not = False
    B = 2

    k_params, k_disc, k_cont = jax.random.split(key, 3)
    params = init_params(k_params, dim_list, use_not)

    disc_num, cont_num = dim_list[0]
    x_disc = jax.random.bernoulli(k_disc, 0.5, (B, disc_num)).astype(jnp.float32)
    x_cont = jax.random.normal(k_cont, (B, cont_num), dtype=jnp.float32)
    x = jnp.concatenate([x_disc, x_cont], axis=1)      # (2, 7)

    cont_out, bin_out = mllp_bottom_forward(x, params, dim_list, use_not)
    jax.block_until_ready((cont_out, bin_out))

    ref_cont, ref_bin = reference_forward(x, params, dim_list, use_not)
    assert cont_out.shape == ref_cont.shape == (B, 2 * dim_list[-1])
    assert bin_out.shape == ref_bin.shape == (B, 2 * dim_list[-1])
    # Continuous path uses chunked log-of-partial-products (mathematically equal,
    # slightly different FP rounding than the strict sum-of-logs reference).
    assert np.allclose(np.asarray(cont_out), np.asarray(ref_cont), rtol=1e-4, atol=1e-5)
    assert np.allclose(np.asarray(bin_out), np.asarray(ref_bin), rtol=1e-4, atol=1e-5)

    print("KERNEL_OK")
</pallas_src>

<mosaic_0001>
module attributes {stable_mosaic.version = 11 : i64} {
  func.func @kernel(%arg0: i32, %arg1: memref<2x4xf32, #tpu.memory_space<vmem>>, %arg2: memref<2x3xf32, #tpu.memory_space<vmem>>, %arg3: memref<3x2xf32, #tpu.memory_space<vmem>>, %arg4: memref<2x16xf32, #tpu.memory_space<vmem>>) attributes {dimension_semantics = [#tpu.dimension_semantics<parallel>], iteration_bounds = array<i64: 1>, scalar_prefetch = 0 : i64, scratch_operands = 0 : i64, tpu.core_type = #tpu.core_type<tc>, window_params = [{transform_indices = @transform_0, window_bounds = array<i64: 2, 4>}, {transform_indices = @transform_1, window_bounds = array<i64: 2, 3>}, {pipeline_mode = #tpu.pipeline_mode<synchronous>, transform_indices = @transform_2, window_bounds = array<i64: 3, 2>}, {transform_indices = @transform_3, window_bounds = array<i64: 2, 16>}]} {
    %c0 = arith.constant 0 : index
    %c0_0 = arith.constant 0 : index
    %0 = vector.load %arg1[%c0, %c0_0] : memref<2x4xf32, #tpu.memory_space<vmem>>, vector<2x4xf32>
    %c0_1 = arith.constant 0 : index
    %c0_2 = arith.constant 0 : index
    %1 = vector.load %arg4[%c0_1, %c0_2] : memref<2x16xf32, #tpu.memory_space<vmem>>, vector<2x4xf32>
    tpu.vector_store %arg4[%c0_1, %c0_2], %0 {strides = array<i32>} : memref<2x16xf32, #tpu.memory_space<vmem>>, vector<2x4xf32>,
    %c0_3 = arith.constant 0 : index
    %c0_4 = arith.constant 0 : index
    %2 = vector.load %arg2[%c0_3, %c0_4] : memref<2x3xf32, #tpu.memory_space<vmem>>, vector<2x1xf32>
    %c0_5 = arith.constant 0 : index
    %c0_6 = arith.constant 0 : index
    %3 = vector.load %arg3[%c0_5, %c0_6] : memref<3x2xf32, #tpu.memory_space<vmem>>, vector<1x2xf32>
    %4 = vector.broadcast %2 : vector<2x1xf32> to vector<2x2xf32>
    %5 = vector.broadcast %3 : vector<1x2xf32> to vector<2x2xf32>
    %6 = arith.cmpf ogt, %4, %5 : vector<2x2xf32>
    %cst = arith.constant 1.000000e+00 : f32
    %cst_7 = arith.constant 0.000000e+00 : f32
    %7 = vector.broadcast %cst : f32 to vector<2x2xf32>
    %8 = vector.broadcast %cst_7 : f32 to vector<2x2xf32>
    %9 = arith.select %6, %7, %8 : vector<2x2xi1>, vector<2x2xf32>
    %c0_8 = arith.constant 0 : index
    %c4 = arith.constant 4 : index
    %10 = vector.load %arg4[%c0_8, %c4] : memref<2x16xf32, #tpu.memory_space<vmem>>, vector<2x2xf32>
    tpu.vector_store %arg4[%c0_8, %c4], %9 {strides = array<i32>} : memref<2x16xf32, #tpu.memory_space<vmem>>, vector<2x2xf32>,
    %cst_9 = arith.constant 1.000000e+00 : f32
    %11 = vector.broadcast %cst_9 : f32 to vector<2x2xf32>
    %12 = arith.subf %11, %9 : vector<2x2xf32>
    %c0_10 = arith.constant 0 : index
    %c10 = arith.constant 10 : index
    %13 = vector.load %arg4[%c0_10, %c10] : memref<2x16xf32, #tpu.memory_space<vmem>>, vector<2x2xf32>
    tpu.vector_store %arg4[%c0_10, %c10], %12 {strides = array<i32>} : memref<2x16xf32, #tpu.memory_space<vmem>>, vector<2x2xf32>,
    %c0_11 = arith.constant 0 : index
    %c1 = arith.constant 1 : index
    %14 = vector.load %arg2[%c0_11, %c1] : memref<2x3xf32, #tpu.memory_space<vmem>>, vector<2x1xf32>
    %c1_12 = arith.constant 1 : index
    %c0_13 = arith.constant 0 : index
    %15 = vector.load %arg3[%c1_12, %c0_13] : memref<3x2xf32, #tpu.memory_space<vmem>>, vector<1x2xf32>
    %16 = vector.broadcast %14 : vector<2x1xf32> to vector<2x2xf32>
    %17 = vector.broadcast %15 : vector<1x2xf32> to vector<2x2xf32>
    %18 = arith.cmpf ogt, %16, %17 : vector<2x2xf32>
    %cst_14 = arith.constant 1.000000e+00 : f32
    %cst_15 = arith.constant 0.000000e+00 : f32
    %19 = vector.broadcast %cst_14 : f32 to vector<2x2xf32>
    %20 = vector.broadcast %cst_15 : f32 to vector<2x2xf32>
    %21 = arith.select %18, %19, %20 : vector<2x2xi1>, vector<2x2xf32>
    %c0_16 = arith.constant 0 : index
    %c6 = arith.constant 6 : index
    %22 = vector.load %arg4[%c0_16, %c6] : memref<2x16xf32, #tpu.memory_space<vmem>>, vector<2x2xf32>
    tpu.vector_store %arg4[%c0_16, %c6], %21 {strides = array<i32>} : memref<2x16xf32, #tpu.memory_space<vmem>>, vector<2x2xf32>,
    %cst_17 = arith.constant 1.000000e+00 : f32
    %23 = vector.broadcast %cst_17 : f32 to vector<2x2xf32>
    %24 = arith.subf %23, %21 : vector<2x2xf32>
    %c0_18 = arith.constant 0 : index
    %c12 = arith.constant 12 : index
    %25 = vector.load %arg4[%c0_18, %c12] : memref<2x16xf32, #tpu.memory_space<vmem>>, vector<2x2xf32>
    tpu.vector_store %arg4[%c0_18, %c12], %24 {strides = array<i32>} : memref<2x16xf32, #tpu.memory_space<vmem>>, vector<2x2xf32>,
    %c0_19 = arith.constant 0 : index
    %c2 = arith.constant 2 : index
    %26 = vector.load %arg2[%c0_19, %c2] : memref<2x3xf32, #tpu.memory_space<vmem>>, vector<2x1xf32>
    %c2_20 = arith.constant 2 : index
    %c0_21 = arith.constant 0 : index
    %27 = vector.load %arg3[%c2_20, %c0_21] : memref<3x2xf32, #tpu.memory_space<vmem>>, vector<1x2xf32>
    %28 = vector.broadcast %26 : vector<2x1xf32> to vector<2x2xf32>
    %29 = vector.broadcast %27 : vector<1x2xf32> to vector<2x2xf32>
    %30 = arith.cmpf ogt, %28, %29 : vector<2x2xf32>
    %cst_22 = arith.constant 1.000000e+00 : f32
    %cst_23 = arith.constant 0.000000e+00 : f32
    %31 = vector.broadcast %cst_22 : f32 to vector<2x2xf32>
    %32 = vector.broadcast %cst_23 : f32 to vector<2x2xf32>
    %33 = arith.select %30, %31, %32 : vector<2x2xi1>, vector<2x2xf32>
    %c0_24 = arith.constant 0 : index
    %c8 = arith.constant 8 : index
    %34 = vector.load %arg4[%c0_24, %c8] : memref<2x16xf32, #tpu.memory_space<vmem>>, vector<2x2xf32>
    tpu.vector_store %arg4[%c0_24, %c8], %33 {strides = array<i32>} : memref<2x16xf32, #tpu.memory_space<vmem>>, vector<2x2xf32>,
    %cst_25 = arith.constant 1.000000e+00 : f32
    %35 = vector.broadcast %cst_25 : f32 to vector<2x2xf32>
    %36 = arith.subf %35, %33 : vector<2x2xf32>
    %c0_26 = arith.constant 0 : index
    %c14 = arith.constant 14 : index
    %37 = vector.load %arg4[%c0_26, %c14] : memref<2x16xf32, #tpu.memory_space<vmem>>, vector<2x2xf32>
    tpu.vector_store %arg4[%c0_26, %c14], %36 {strides = array<i32>} : memref<2x16xf32, #tpu.memory_space<vmem>>, vector<2x2xf32>,
    return
  }
  func.func @transform_0(%arg0: i32) -> (i32, i32) {
    %c0_i32 = arith.constant 0 : i32
    %c0_i32_0 = arith.constant 0 : i32
    return %arg0, %c0_i32 : i32, i32
  }
  func.func @transform_1(%arg0: i32) -> (i32, i32) {
    %c0_i32 = arith.constant 0 : i32
    %c0_i32_0 = arith.constant 0 : i32
    return %arg0, %c0_i32 : i32, i32
  }
  func.func @transform_2(%arg0: i32) -> (i32, i32) {
    %c0_i32 = arith.constant 0 : i32
    %c0_i32_0 = arith.constant 0 : i32
    %c0_i32_1 = arith.constant 0 : i32
    return %c0_i32, %c0_i32_0 : i32, i32
  }
  func.func @transform_3(%arg0: i32) -> (i32, i32) {
    %c0_i32 = arith.constant 0 : i32
    %c0_i32_0 = arith.constant 0 : i32
    return %arg0, %c0_i32 : i32, i32
  }
}

</mosaic_0001>

<llo_original>
// kernel: tpu_custom_call.1
$region0: #{tpu_custom_call.1}
  #allocation0 [shape = 'u32[]', space=smem, size = 0x4, offset = 0x4, fixed_abs, tag = 'smem constant byte address 0x4 - core index']
  #allocation1 [shape = 'u32[72,128]{1,0:T(1,128)}', space=vmem, size = 0x9000, scoped, tag = 'internal scratch']
  %s0 = inlined_call_operand.vmem [shape: f32[2,4], index: 0, kind: input, shape index: {}]
  %s1 = inlined_call_operand.vmem [shape: f32[2,3], index: 1, kind: input, shape index: {}]
  %s2 = inlined_call_operand.vmem [shape: f32[3,2], index: 2, kind: input, shape index: {}]
  %s3 = inlined_call_operand.hbm [shape: f32[2,16], index: 3, kind: output, shape index: {}]
  %s4 = sld [smem:[#allocation0]]
  $region22: #{tpu_custom_call.1} parent=0
    _
  %s6 = ssub.s32 1, %s4
  %s7 = scalar_select 0, %s6, %s4
  $region1: #{tpu_custom_call.1} parent=0
    #allocation2 [shape = 'u8[1024]{0}', space=vmem, size = 0x400, scoped, tag = 'output window, operand 0, single buffered']
    #allocation3 [shape = 's32[1]{0}', space=sflag, size = 0x4, scoped, tag = 'scoped memory for tpu_custom_call.1']
    %8 = vsyncpa [#allocation3], 0
    // Predicated region
    $region2: #{tpu_custom_call.1} parent=1 // pred_check
      _
    $region3: #{tpu_custom_call.1} parent=1 // pred_check_branch
      %10 = sbr.rel (0) target = $region5
    $region4: #{tpu_custom_call.1} parent=1 // pred_region
      _
    $region5: #{tpu_custom_call.1} parent=1 // pred_fallthru
      _
    // Predicated region
    $region6: #{tpu_custom_call.1} parent=1 // pred_check
      _
    $region7: #{tpu_custom_call.1} parent=1 // pred_check_branch
      %12 = sbr.rel (0) target = $region9
    $region8: #{tpu_custom_call.1} parent=1 // pred_region
      _
    $region9: #{tpu_custom_call.1} parent=1 // pred_fallthru
      _
    // Predicated region
    $region10: #{tpu_custom_call.1} parent=1 // pred_check
      _
    $region11: #{tpu_custom_call.1} parent=1 // pred_check_branch
      %14 = sbr.rel (0) target = $region13
    $region12: #{tpu_custom_call.1} parent=1 // pred_region
      _
    $region13: #{tpu_custom_call.1} parent=1 // pred_fallthru
      _
    %v15 = vld [vmem:[%s0] sm:$0x3]
    %vm16 = vcmask 25600
    %17 = vst.msk [vmem:[#allocation2] sm:$0x3] %vm16, %v15
    %v18 = vld [vmem:[%s1] sm:$0x3]
    %v19 = vld [vmem:[%s2] sm:$0x1]
    %21 = vset.pattern.permute.xlu0 0
    %22 = vperm.xlu0 %21, %v18
    %v23 = vpop.permute.xlu0 %22
    %v25 = vperm.slane %v19, 0
    %vm26 = vcmp.gt.f32.partialorder %v23, %v25
    %v27 = vsel %vm26, 1.0, 0.0
    %29 = vrot.lane.b32.xlu0 %v27, 4
    %v30 = vpop.permute.xlu0 %29
    %vm32 = vcmask 42016
    %33 = vst.msk [vmem:[#allocation2] sm:$0x3] %vm32, %v30
    %v34 = vsub.f32 1.0, %v27
    %36 = vrot.lane.b32.xlu0 %v34, 10
    %v37 = vpop.permute.xlu0 %36
    %vm39 = vcmask 91216
    %40 = vst.msk [vmem:[#allocation2] sm:$0x3] %vm39, %v37
    %v41 = vld [vmem:[%s1] sm:$0x3]
    %v42 = vld [vmem:[%s2 + $0x1] sm:$0x1]
    %44 = vset.pattern.permute.xlu0 1
    %45 = vperm.xlu0 %44, %v41
    %v46 = vpop.permute.xlu0 %45
    %v48 = vperm.slane %v42, 0
    %vm49 = vcmp.gt.f32.partialorder %v46, %v48
    %v50 = vsel %vm49, 1.0, 0.0
    %52 = vrot.lane.b32.xlu0 %v50, 6
    %v53 = vpop.permute.xlu0 %52
    %vm55 = vcmask 58416
    %56 = vst.msk [vmem:[#allocation2] sm:$0x3] %vm55, %v53
    %v57 = vsub.f32 1.0, %v50
    %59 = vrot.lane.b32.xlu0 %v57, 12
    %v60 = vpop.permute.xlu0 %59
    %vm62 = vcmask 107616
    %63 = vst.msk [vmem:[#allocation2] sm:$0x3] %vm62, %v60
    %v64 = vld [vmem:[%s1] sm:$0x3]
    %v65 = vld [vmem:[%s2 + $0x2] sm:$0x1]
    %67 = vset.pattern.permute.xlu0 2
    %68 = vperm.xlu0 %67, %v64
    %v69 = vpop.permute.xlu0 %68
    %v71 = vperm.slane %v65, 0
    %vm72 = vcmp.gt.f32.partialorder %v69, %v71
    %v73 = vsel %vm72, 1.0, 0.0
    %75 = vrot.lane.b32.xlu0 %v73, 8
    %v76 = vpop.permute.xlu0 %75
    %vm78 = vcmask 74816
    %79 = vst.msk [vmem:[#allocation2] sm:$0x3] %vm78, %v76
    %v80 = vsub.f32 1.0, %v73
    %82 = vrot.lane.b32.xlu0 %v80, 14
    %v83 = vpop.permute.xlu0 %82
    %vm85 = vcmask 124016
    %86 = vst.msk [vmem:[#allocation2] sm:$0x3] %vm85, %v83
    // Predicated region
    $region14: #{tpu_custom_call.1} parent=1 // pred_check
      _
    $region15: #{tpu_custom_call.1} parent=1 // pred_check_branch
      %88 = sbr.rel (0) target = $region17
    $region16: #{tpu_custom_call.1} parent=1 // pred_region
      %90 = vsyncadd [#allocation3], 0
      %s92 = sshll.u32 [#allocation2], 4
      %s93 = int_to_ptr.vmem [resolvable:$true] %s92
      %s94 = sshll.u32 %s3, 4
      %s95 = int_to_ptr.hbm [resolvable:$true] %s94
      %97 = dma.vmem_to_hbm [thread:$0]  %s93, 32, %s95, [#allocation3]
    $region17: #{tpu_custom_call.1} parent=1 // pred_fallthru
      _
    // Predicated region
    $region18: #{tpu_custom_call.1} parent=1 // pred_check
      _
    $region19: #{tpu_custom_call.1} parent=1 // pred_check_branch
      %99 = sbr.rel (0) target = $region21
    $region20: #{tpu_custom_call.1} parent=1 // pred_region
      %101 = dma.done [#allocation3], 32
    $region21: #{tpu_custom_call.1} parent=1 // pred_fallthru
      _
    %102 = vsyncpa [#allocation3], 1

</llo_original>
